<compile_context>
chip_gen: v6e
topology: v6e:2x2x1
jax: 0.10.0
libtpu: 0.0.40
codegen_flags: <defaults>
</compile_context>

<pallas_src>
import jax
import jax.numpy as jnp
from jax import lax
from jax.experimental import pallas as pl
from jax.experimental.pallas import tpu as pltpu


def _round_up(v, m):
    return (v + m - 1) // m * m


# ---------------------------------------------------------------------------
# Generation-aware VMEM budget (v5e/v6e: 128 MiB physical, v7x: 64 MiB).
# ---------------------------------------------------------------------------
def _vmem_capacity_bytes():
    try:
        info = pltpu.get_tpu_info()
        cap = getattr(info, "vmem_capacity_bytes", None)
        if cap:
            return int(cap)
    except Exception:
        pass
    return 64 * 1024 * 1024  # conservative fallback: v7x per-TensorCore VMEM


_VMEM_CAPACITY = _vmem_capacity_bytes()
# Leave headroom for compiler-internal scratch; cap below the physical size.
_VMEM_LIMIT = min(int(_VMEM_CAPACITY * 0.75), 100 * 1024 * 1024)
# Working-set budget for (double-buffered) tiles.
_TILE_BUDGET = _VMEM_LIMIT // 2

_MAX_TM = 256
_MAX_TN = 512


# ---------------------------------------------------------------------------
# Kernels
# ---------------------------------------------------------------------------
def _linear_kernel_single_k(x_ref, w_ref, b_ref, o_ref):
    """Whole K in one block: one dot, no accumulator, no branches."""
    # x: (tm, K), w: (tn, K) in native [out, in] layout, b: (1, tn).
    o_ref[...] = (
        lax.dot_general(
            x_ref[...],
            w_ref[...],
            dimension_numbers=(((1,), (1,)), ((), ())),
            preferred_element_type=jnp.float32,
        )
        + b_ref[...]
    ).astype(o_ref.dtype)


def _linear_kernel_multi_k(x_ref, w_ref, b_ref, o_ref):
    """K split across the last grid axis; accumulate directly into o_ref.

    The output block index (i, j) is constant along k, so o_ref stays resident
    in VMEM and doubles as the accumulator (no scratch, no finalize copy).
    """
    k = pl.program_id(2)
    partial = lax.dot_general(
        x_ref[...],
        w_ref[...],
        dimension_numbers=(((1,), (1,)), ((), ())),
        preferred_element_type=jnp.float32,
    )

    @pl.when(k == 0)
    def _():
        o_ref[...] = partial + b_ref[...]

    @pl.when(k > 0)
    def _():
        o_ref[...] = o_ref[...] + partial


# ---------------------------------------------------------------------------
# Tiling heuristic
# ---------------------------------------------------------------------------
def _pick_tiles(B, K, N):
    # M tile: full-dim block (exempt from the 8-sublane rule) when small,
    # otherwise an 8-aligned tile with zero padding.
    if B <= _MAX_TM:
        tm, Mp = B, B
    else:
        tm = _MAX_TM
        Mp = _round_up(B, tm)

    # N tile: full-dim block when small; otherwise prefer a 128-multiple that
    # divides N exactly (no padding); pad only as a last resort.
    if N <= _MAX_TN:
        tn, Np = N, N
    else:
        tn, Np = None, N
        for t in (512, 384, 256, 128):
            if N % t == 0:
                tn = t
                break
        if tn is None:
            tn = _MAX_TN
            Np = _round_up(N, tn)

    # Keep >= 2 blocks on a parallel axis so both v7x TensorCores get work.
    if Mp // tm == 1 and Np // tn == 1:
        if tn % 256 == 0:
            tn //= 2
        elif tm % 16 == 0:
            tm //= 2

    # K tile: keep the whole reduction in one block when it fits the VMEM
    # budget (single-dot kernel); otherwise split on a 128-aligned tile.
    def fits(tk):
        need = 4 * (2 * tm * tk + 2 * tn * tk + 2 * tm * tn + 2 * tn)
        return need <= _TILE_BUDGET

    if fits(K):
        tk, Kp = K, K
    else:
        tk = 2048
        while tk > 128 and not fits(tk):
            tk //= 2
        Kp = _round_up(K, tk)

    return tm, tn, tk, Mp, Np, Kp


# ---------------------------------------------------------------------------
# Wrapper
# ---------------------------------------------------------------------------
@jax.jit
def mlp_encoder(x, weight, bias):
    """Pallas MLPEncoder.forward.

    x:      [B, init_dim]
    weight: [bottleneck_dim, init_dim]   (native PyTorch nn.Linear layout)
    bias:   [bottleneck_dim]
    returns [B, bottleneck_dim]
    """
    B, K = x.shape
    N, K2 = weight.shape
    assert K == K2, (K, K2)

    x = x.astype(jnp.float32)
    w = weight.astype(jnp.float32)              # keep [N, K]; no transpose copy
    b = bias.astype(jnp.float32).reshape(1, N)

    tm, tn, tk, Mp, Np, Kp = _pick_tiles(B, K, N)

    # Pad only where actually misaligned (zero pads along K are exact; padded
    # M rows / N columns are sliced off at the end).
    if (Mp, Kp) != (B, K):
        x = jnp.pad(x, ((0, Mp - B), (0, Kp - K)))
    if (Np, Kp) != (N, K):
        w = jnp.pad(w, ((0, Np - N), (0, Kp - K)))
    if Np != N:
        b = jnp.pad(b, ((0, 0), (0, Np - N)))

    gm, gn, gk = Mp // tm, Np // tn, Kp // tk

    cost = pl.CostEstimate(
        flops=2 * Mp * Np * Kp,
        transcendentals=0,
        bytes_accessed=4 * (Mp * Kp * gn + Np * Kp * gm + Mp * Np + Np),
    )
    compiler_params = pltpu.CompilerParams(
        dimension_semantics=(
            ("parallel", "parallel")
            if gk == 1
            else ("parallel", "parallel", "arbitrary")
        ),
        vmem_limit_bytes=_VMEM_LIMIT,
    )

    if gk == 1:
        kernel = _linear_kernel_single_k
        grid_spec = pltpu.PrefetchScalarGridSpec(
            num_scalar_prefetch=0,
            grid=(gm, gn),
            in_specs=[
                pl.BlockSpec((tm, tk), lambda i, j: (i, 0)),   # x tile
                pl.BlockSpec((tn, tk), lambda i, j: (j, 0)),   # W tile (native [N,K])
                pl.BlockSpec((1, tn), lambda i, j: (0, j)),    # bias tile
            ],
            out_specs=pl.BlockSpec((tm, tn), lambda i, j: (i, j)),
        )
    else:
        kernel = _linear_kernel_multi_k
        grid_spec = pltpu.PrefetchScalarGridSpec(
            num_scalar_prefetch=0,
            grid=(gm, gn, gk),
            in_specs=[
                pl.BlockSpec((tm, tk), lambda i, j, k: (i, k)),
                pl.BlockSpec((tn, tk), lambda i, j, k: (j, k)),
                pl.BlockSpec((1, tn), lambda i, j, k: (0, j)),
            ],
            out_specs=pl.BlockSpec((tm, tn), lambda i, j, k: (i, j)),
        )

    out = pl.pallas_call(
        kernel,
        out_shape=jax.ShapeDtypeStruct((Mp, Np), jnp.float32),
        grid_spec=grid_spec,
        compiler_params=compiler_params,
        cost_estimate=cost,
    )(x, w, b)

    if (Mp, Np) != (B, N):
        out = out[:B, :N]
    return out


def _reference(x, weight, bias):
    """Pure-JAX reference of the PyTorch forward (Dropout(p=0) is identity)."""
    return x @ weight.T + bias


def make_params(key, init_dim, bottleneck_dim):
    """Mirror init_weights: xavier_uniform_ on weight, bias filled with 0.01."""
    bound = jnp.sqrt(6.0 / (init_dim + bottleneck_dim))
    weight = jax.random.uniform(
        key, (bottleneck_dim, init_dim), jnp.float32, -bound, bound
    )
    bias = jnp.full((bottleneck_dim,), 0.01, jnp.float32)
    return weight, bias


if __name__ == "__main__":
    # Small demo shapes consistent with the module: [BATCH, init_dim] input.
    B, init_dim, bottleneck_dim = 16, 32, 64

    key = jax.random.PRNGKey(0)
    kx, kw = jax.random.split(key)
    x = jax.random.normal(kx, (B, init_dim), jnp.float32)
    weight, bias = make_params(kw, init_dim, bottleneck_dim)

    out = mlp_encoder(x, weight, bias)
    out = jax.block_until_ready(out)

    ref = _reference(x, weight, bias)
    assert out.shape == (B, bottleneck_dim), out.shape
    assert jnp.allclose(out, ref, atol=1e-5, rtol=1e-5), float(
        jnp.max(jnp.abs(out - ref))
    )

    # TODO(synk): Dropout with p > 0 (training-mode RNG masking) is not
    # implemented; the module defaults (p_dropout=0, p_dropout_hidden=0) make
    # both Dropout layers the identity.
    print("KERNEL_OK")
</pallas_src>

<mosaic_0001>
module attributes {stable_mosaic.version = 11 : i64} {
  func.func @_linear_kernel_single_k(%arg0: i32, %arg1: i32, %arg2: memref<8x32xf32, #tpu.memory_space<vmem>>, %arg3: memref<64x32xf32, #tpu.memory_space<vmem>>, %arg4: memref<1x64xf32, #tpu.memory_space<vmem>>, %arg5: memref<8x64xf32, #tpu.memory_space<vmem>>) attributes {dimension_semantics = [#tpu.dimension_semantics<parallel>, #tpu.dimension_semantics<parallel>], iteration_bounds = array<i64: 2, 1>, scalar_prefetch = 0 : i64, scratch_operands = 0 : i64, tpu.core_type = #tpu.core_type<tc>, window_params = [{transform_indices = @transform_0, window_bounds = array<i64: 8, 32>}, {transform_indices = @transform_1, window_bounds = array<i64: 64, 32>}, {transform_indices = @transform_2, window_bounds = array<i64: 1, 64>}, {transform_indices = @transform_3, window_bounds = array<i64: 8, 64>}]} {
    %c0 = arith.constant 0 : index
    %c0_0 = arith.constant 0 : index
    %0 = vector.load %arg2[%c0, %c0_0] : memref<8x32xf32, #tpu.memory_space<vmem>>, vector<8x32xf32>
    %c0_1 = arith.constant 0 : index
    %c0_2 = arith.constant 0 : index
    %1 = vector.load %arg3[%c0_1, %c0_2] : memref<64x32xf32, #tpu.memory_space<vmem>>, vector<64x32xf32>
    %cst = arith.constant dense<0.000000e+00> : vector<8x64xf32>
    %2 = tpu.matmul %0, %1, %cst {dimension_numbers = #tpu.dot_dimension_numbers<[1], [1], [0], [0], [0, 0, 1, 0], [], []>} : vector<8x32xf32>, vector<64x32xf32>, vector<8x64xf32> -> vector<8x64xf32>
    %c0_3 = arith.constant 0 : index
    %c0_4 = arith.constant 0 : index
    %3 = vector.load %arg4[%c0_3, %c0_4] : memref<1x64xf32, #tpu.memory_space<vmem>>, vector<1x64xf32>
    %4 = vector.broadcast %3 : vector<1x64xf32> to vector<8x64xf32>
    %5 = arith.addf %2, %4 : vector<8x64xf32>
    %c0_5 = arith.constant 0 : index
    %c0_6 = arith.constant 0 : index
    %6 = vector.load %arg5[%c0_5, %c0_6] : memref<8x64xf32, #tpu.memory_space<vmem>>, vector<8x64xf32>
    tpu.vector_store %arg5[%c0_5, %c0_6], %5 {strides = array<i32>} : memref<8x64xf32, #tpu.memory_space<vmem>>, vector<8x64xf32>,
    return
  }
  func.func @transform_0(%arg0: i32, %arg1: i32) -> (i32, i32) {
    %c0_i32 = arith.constant 0 : i32
    %c0_i32_0 = arith.constant 0 : i32
    return %arg0, %c0_i32 : i32, i32
  }
  func.func @transform_1(%arg0: i32, %arg1: i32) -> (i32, i32) {
    %c0_i32 = arith.constant 0 : i32
    %c0_i32_0 = arith.constant 0 : i32
    return %arg1, %c0_i32 : i32, i32
  }
  func.func @transform_2(%arg0: i32, %arg1: i32) -> (i32, i32) {
    %c0_i32 = arith.constant 0 : i32
    %c0_i32_0 = arith.constant 0 : i32
    return %c0_i32, %arg1 : i32, i32
  }
  func.func @transform_3(%arg0: i32, %arg1: i32) -> (i32, i32) {
    %c0_i32 = arith.constant 0 : i32
    return %arg0, %arg1 : i32, i32
  }
}

</mosaic_0001>

<llo_original>
// kernel: mlp_encoder.1
$region0: #{mlp_encoder.1}
  #allocation0 [shape = 'u32[]', space=smem, size = 0x4, offset = 0x4, fixed_abs, tag = 'smem constant byte address 0x4 - core index']
  #allocation1 [shape = 'u32[144,128]{1,0:T(1,128)}', space=vmem, size = 0x12000, scoped, tag = 'internal scratch']
  %s0 = inlined_call_operand.vmem [shape: f32[16,32], index: 0, kind: input, shape index: {}]
  %s1 = inlined_call_operand.vmem [shape: f32[64,32], index: 1, kind: input, shape index: {}]
  %s2 = inlined_call_operand.vmem [shape: f32[1,64], index: 2, kind: input, shape index: {}]
  %s3 = inlined_call_operand.hbm [shape: f32[16,64], index: 3, kind: output, shape index: {}]
  %s4 = sld [smem:[#allocation0]]
  $region45: #{mlp_encoder.1} parent=0
    _
  %s6 = ssub.s32 1, %s4
  %s7 = scalar_select 0, %s6, %s4
  $region1: #{mlp_encoder.1} parent=0
    #allocation2 [shape = 'u8[8192]{0}', space=vmem, size = 0x2000, scoped, tag = 'output window, operand 0']
    #allocation3 [shape = 's32[2]{0}', space=sflag, size = 0x8, scoped, tag = 'scoped memory for mlp_encoder.1']
    %8 = vsyncpa [#allocation3], 0
    %s9 = scalar_lea.sflag [#allocation3], 1
    %10 = vsyncpa %s9, 0
    loop: start=0, step=1, limit=4
    $region2: #{mlp_encoder.1} parent=1 // loop_pre_header
      _
    $region3: #{mlp_encoder.1} parent=1 // loop_header
      %s12 = sphi 0, %s16
      %p13 = scmp.ge.s32.totalorder %s12, 4
      %s19 = sphi 0, %s31
      %s20 = sphi 0, %s27
      %s21 = sphi 0, %s19
      %s22 = sphi 0, %s20
      %s23 = sphi 0, %s21
      %s24 = sphi 0, %s22
      %s34 = sphi 0, %s36
      %s37 = sphi 0, %s34
      %s38 = sphi 0, %s37
      %s54 = sphi 0, %s38
      %s60 = sphi 0, %s62
      %s63 = sphi 0, %s60
      %s64 = sphi 0, %s63
      %s80 = sphi 0, %s64
      %s86 = sphi 0, %s88
      %s89 = sphi 0, %s86
      %s90 = sphi 0, %s89
      %s106 = sphi 0, %s90
      %s114 = sphi 0, %s116
      %s117 = sphi 0, %s114
      %s118 = sphi 0, %s117
      %s134 = sphi 0, %s118
    $region4: #{mlp_encoder.1} parent=1 // loop_header_branch
      %15 = sbr.rel (%p13) target = $region8
    $region5: #{mlp_encoder.1} parent=1 // loop_body
      %s17 = ssub.s32 %s12, 1
      %s18 = ssub.s32 %s12, 2
      %s25 = sadd.s32 1, %s20
      %p26 = scmp.ge.s32.totalorder %s25, 1
      %s27 = scalar_select %p26, 0, %s25
      %s28 = sadd.s32 1, %s19
      %s29 = scalar_select %p26, %s28, %s19
      %p30 = scmp.ge.s32.totalorder %s29, 2
      %s31 = scalar_select %p30, 0, %s29
      %s32 = ssub.s32 %s19, %s31
      %p33 = scmp.eq.s32.totalorder %s32, 0
      %s35 = sadd.s32 %s34, 1
      %s36 = scalar_select %p33, %s34, %s35
      %p39 = pneg %p33
      %p40 = scmp.eq.s32.totalorder %s12, 1
      %p41 = por %p39, %p40
      %p42 = scmp.ne.s32.totalorder %s34, %s37
      %p43 = scmp.eq.s32.totalorder %s12, 0
      %p44 = por %p42, %p43
      %p45 = scmp.ne.s32.totalorder %s34, %s37
      %p46 = scmp.eq.s32.totalorder %s17, 1
      %p47 = por %p45, %p46
      %p48 = scmp.ne.s32.totalorder %s37, %s38
      %p49 = scmp.eq.s32.totalorder %s17, 0
      %p50 = por %p48, %p49
      %p51 = scmp.ne.s32.totalorder %s37, %s38
      %p52 = scmp.eq.s32.totalorder %s18, 1
      %p53 = por %p51, %p52
      %p55 = scmp.ne.s32.totalorder %s38, %s54
      %p56 = scmp.eq.s32.totalorder %s18, 0
      %p57 = por %p55, %p56
      %s58 = ssub.s32 %s20, %s27
      %p59 = scmp.eq.s32.totalorder %s58, 0
      %s61 = sadd.s32 %s60, 1
      %s62 = scalar_select %p59, %s60, %s61
      %p65 = pneg %p59
      %p66 = scmp.eq.s32.totalorder %s12, 1
      %p67 = por %p65, %p66
      %p68 = scmp.ne.s32.totalorder %s60, %s63
      %p69 = scmp.eq.s32.totalorder %s12, 0
      %p70 = por %p68, %p69
      %p71 = scmp.ne.s32.totalorder %s60, %s63
      %p72 = scmp.eq.s32.totalorder %s17, 1
      %p73 = por %p71, %p72
      %p74 = scmp.ne.s32.totalorder %s63, %s64
      %p75 = scmp.eq.s32.totalorder %s17, 0
      %p76 = por %p74, %p75
      %p77 = scmp.ne.s32.totalorder %s63, %s64
      %p78 = scmp.eq.s32.totalorder %s18, 1
      %p79 = por %p77, %p78
      %p81 = scmp.ne.s32.totalorder %s64, %s80
      %p82 = scmp.eq.s32.totalorder %s18, 0
      %p83 = por %p81, %p82
      %s84 = ssub.s32 %s20, %s27
      %p85 = scmp.eq.s32.totalorder %s84, 0
      %s87 = sadd.s32 %s86, 1
      %s88 = scalar_select %p85, %s86, %s87
      %p91 = pneg %p85
      %p92 = scmp.eq.s32.totalorder %s12, 1
      %p93 = por %p91, %p92
      %p94 = scmp.ne.s32.totalorder %s86, %s89
      %p95 = scmp.eq.s32.totalorder %s12, 0
      %p96 = por %p94, %p95
      %p97 = scmp.ne.s32.totalorder %s86, %s89
      %p98 = scmp.eq.s32.totalorder %s17, 1
      %p99 = por %p97, %p98
      %p100 = scmp.ne.s32.totalorder %s89, %s90
      %p101 = scmp.eq.s32.totalorder %s17, 0
      %p102 = por %p100, %p101
      %p103 = scmp.ne.s32.totalorder %s89, %s90
      %p104 = scmp.eq.s32.totalorder %s18, 1
      %p105 = por %p103, %p104
      %p107 = scmp.ne.s32.totalorder %s90, %s106
      %p108 = scmp.eq.s32.totalorder %s18, 0
      %p109 = por %p107, %p108
      %s110 = ssub.s32 %s19, %s31
      %s111 = ssub.s32 %s20, %s27
      %s112 = sor.u32 %s110, %s111
      %p113 = scmp.eq.s32.totalorder %s112, 0
      %s115 = sadd.s32 %s114, 1
      %s116 = scalar_select %p113, %s114, %s115
      %p119 = pneg %p113
      %p120 = scmp.eq.s32.totalorder %s12, 1
      %p121 = por %p119, %p120
      %p122 = scmp.ne.s32.totalorder %s114, %s117
      %p123 = scmp.eq.s32.totalorder %s12, 0
      %p124 = por %p122, %p123
      %p125 = scmp.ne.s32.totalorder %s114, %s117
      %p126 = scmp.eq.s32.totalorder %s17, 1
      %p127 = por %p125, %p126
      %p128 = scmp.ne.s32.totalorder %s117, %s118
      %p129 = scmp.eq.s32.totalorder %s17, 0
      %p130 = por %p128, %p129
      %p131 = scmp.ne.s32.totalorder %s117, %s118
      %p132 = scmp.eq.s32.totalorder %s18, 1
      %p133 = por %p131, %p132
      %p135 = scmp.ne.s32.totalorder %s118, %s134
      %p136 = scmp.eq.s32.totalorder %s18, 0
      %p137 = por %p135, %p136
      %p138 = scmp.le.s32.totalorder 1, %s12
      %p139 = scmp.lt.s32.totalorder %s12, 3
      %p140 = pnand %p138, %p139
      %p141 = pneg %p140
      // Predicated region
      $region9: #{mlp_encoder.1} parent=5 // pred_check
        _
      $region10: #{mlp_encoder.1} parent=5 // pred_check_branch
        %143 = sbr.rel (%p140) target = $region12
      $region11: #{mlp_encoder.1} parent=5 // pred_region
        %s144 = ssub.s32 %s12, 1
        // Predicated region
        $region13: #{mlp_encoder.1} parent=11 // pred_check
          %p145 = pneg %p76
        $region14: #{mlp_encoder.1} parent=11 // pred_check_branch
          %147 = sbr.rel (%p145) target = $region16
        $region15: #{mlp_encoder.1} parent=11 // pred_region
          %s148 = smul.u32 8, %s22
          %p149 = scmp.lt.s32.totalorder %s148, 7
          %s150 = scalar_select %p149, %s148, 7
          %s151 = smul.addr %s150, 8
          %s152 = scalar_lea.vmem %s1, %s151
          %s153 = smul.u32 8, %s22
        $region16: #{mlp_encoder.1} parent=11 // pred_fallthru
          _
        // Predicated region
        $region17: #{mlp_encoder.1} parent=11 // pred_check
          %p154 = pneg %p102
        $region18: #{mlp_encoder.1} parent=11 // pred_check_branch
          %156 = sbr.rel (%p154) target = $region20
        $region19: #{mlp_encoder.1} parent=11 // pred_region
          %p157 = scmp.lt.s32.totalorder %s22, 0
          %s158 = scalar_select %p157, %s22, 0
          %s159 = scalar_lea.vmem %s2, %s158
        $region20: #{mlp_encoder.1} parent=11 // pred_fallthru
          _
      $region12: #{mlp_encoder.1} parent=5 // pred_fallthru
        _
      %p160 = scmp.lt.s32.totalorder %s12, 2
      // Predicated region
      $region21: #{mlp_encoder.1} parent=5 // pred_check
        %p161 = pneg %p160
      $region22: #{mlp_encoder.1} parent=5 // pred_check_branch
        %163 = sbr.rel (%p161) target = $region24
      $region23: #{mlp_encoder.1} parent=5 // pred_region
        // Predicated region
        $region25: #{mlp_encoder.1} parent=23 // pred_check
          %p164 = pneg %p44
        $region26: #{mlp_encoder.1} parent=23 // pred_check_branch
          %166 = sbr.rel (%p164) target = $region28
        $region27: #{mlp_encoder.1} parent=23 // pred_region
          %p167 = scmp.lt.s32.totalorder %s19, 1
          %s168 = scalar_select %p167, %s19, 1
          %s169 = smul.addr %s168, 8
          %s170 = scalar_lea.vmem %s0, %s169
        $region28: #{mlp_encoder.1} parent=23 // pred_fallthru
          _
      $region24: #{mlp_encoder.1} parent=5 // pred_fallthru
        _
      %p171 = scmp.le.s32.totalorder 1, %s12
      %p172 = scmp.lt.s32.totalorder %s12, 3
      %p173 = pnand %p171, %p172
      %p174 = pneg %p173
      // Predicated region
      $region29: #{mlp_encoder.1} parent=5 // pred_check
        _
      $region30: #{mlp_encoder.1} parent=5 // pred_check_branch
        %176 = sbr.rel (%p173) target = $region32
      $region31: #{mlp_encoder.1} parent=5 // pred_region
        %s177 = ssub.s32 %s12, 1
        %p178 = scmp.lt.s32.totalorder %s21, 1
        %s179 = scalar_select %p178, %s21, 1
        %s180 = smul.addr %s179, 8
        %s181 = scalar_lea.vmem %s0, %s180
        %p182 = pneg %p50
        %p183 = pneg %p47
        %s184 = smul.u32 8, %s22
        %p185 = scmp.lt.s32.totalorder %s184, 7
        %s186 = scalar_select %p185, %s184, 7
        %s187 = smul.addr %s186, 8
        %s188 = scalar_lea.vmem %s1, %s187
        %p189 = pneg %p76
        %p190 = pneg %p73
        %p191 = scmp.lt.s32.totalorder %s22, 0
        %s192 = scalar_select %p191, %s22, 0
        %s193 = scalar_lea.vmem %s2, %s192
        %p194 = pneg %p102
        %p195 = pneg %p99
        %p196 = pneg %p130
        %p197 = pneg %p127
        %s198 = sand.u32 %s117, 1
        %s199 = scalar_lea.sflag [#allocation3], %s198
        %s200 = sand.u32 %s117, 1
        %s201 = smul.addr %s200, 8
        %s202 = scalar_lea.vmem [#allocation2], %s201
        %p203 = scmp.lt.s32.totalorder %s21, 1
        %s204 = scalar_select %p203, %s21, 1
        %s205 = smul.addr %s204, 8
        %s206 = scalar_lea.vmem %s0, %s205
        %s207 = smul.u32 8, %s22
        %p208 = scmp.lt.s32.totalorder %s207, 7
        %s209 = scalar_select %p208, %s207, 7
        %s210 = smul.addr %s209, 8
        %s211 = scalar_lea.vmem %s1, %s210
        %s212 = smul.u32 8, %s22
        %p213 = scmp.lt.s32.totalorder %s22, 0
        %s214 = scalar_select %p213, %s22, 0
        %s215 = scalar_lea.vmem %s2, %s214
        %v216 = vld [vmem:[%s206] sm:$0xff]
        %v217 = vld [vmem:[%s211] sm:$0xff]
        %v218 = vld [vmem:[%s211 + $0x8] sm:$0xff]
        %v219 = vld [vmem:[%s211 + $0x10] sm:$0xff]
        %v220 = vld [vmem:[%s211 + $0x18] sm:$0xff]
        %v221 = vld [vmem:[%s211 + $0x20] sm:$0xff]
        %v222 = vld [vmem:[%s211 + $0x28] sm:$0xff]
        %v223 = vld [vmem:[%s211 + $0x30] sm:$0xff]
        %v224 = vld [vmem:[%s211 + $0x38] sm:$0xff]
        %v225 = vld [vmem:[%s215] sm:$0x1]
        %v227 = vlaneseq
        %v228 = vshrl.u32 %v227, 7
        %v229 = vsub.s32 0, %v228
        %v230 = vrot.slane %v225, %v229
        %vm232 = vcmask 261120
        %v234 = vsel %vm232, %v216, 0
        %v237 = vsel %vm232, %v217, 0
        %v240 = vsel %vm232, %v218, 0
        %v243 = vsel %vm232, %v219, 0
        %v246 = vsel %vm232, %v220, 0
        %v249 = vsel %vm232, %v221, 0
        %v252 = vsel %vm232, %v222, 0
        %v255 = vsel %vm232, %v223, 0
        %v258 = vsel %vm232, %v224, 0
        %260 = vmatprep.subr.mxu0 0.0
        %261 = vmatpush1.xpose.msra.mxu0 0.0
        %262 = vmatprep.subr.mxu0 0.0
        %263 = vmatpush1.xpose.msra.mxu0 0.0
        %264 = vmatprep.subr.mxu0 0.0
        %265 = vmatpush1.xpose.msra.mxu0 0.0
        %266 = vmatprep.subr.mxu0 0.0
        %267 = vmatpush1.xpose.msra.mxu0 0.0
        %268 = vmatprep.subr.mxu0 0.0
        %269 = vmatpush1.xpose.msra.mxu0 0.0
        %270 = vmatprep.subr.mxu0 0.0
        %271 = vmatpush1.xpose.msra.mxu0 0.0
        %272 = vmatprep.subr.mxu0 0.0
        %273 = vmatpush1.xpose.msra.mxu0 0.0
        %274 = vmatprep.subr.mxu0 0.0
        %275 = vmatpush1.xpose.msra.mxu0 0.0
        %276 = vmatprep.subr.mxu0 0.0
        %277 = vmatpush1.xpose.msra.mxu0 %v258
        %278 = vmatprep.subr.mxu0 0.0
        %279 = vmatpush1.xpose.msra.mxu0 %v255
        %280 = vmatprep.subr.mxu0 0.0
        %281 = vmatpush1.xpose.msra.mxu0 %v252
        %282 = vmatprep.subr.mxu0 0.0
        %283 = vmatpush1.xpose.msra.mxu0 %v249
        %284 = vmatprep.subr.mxu0 0.0
        %285 = vmatpush1.xpose.msra.mxu0 %v246
        %286 = vmatprep.subr.mxu0 0.0
        %287 = vmatpush1.xpose.msra.mxu0 %v243
        %288 = vmatprep.subr.mxu0 0.0
        %289 = vmatpush1.xpose.msra.mxu0 %v240
        %290 = vmatprep.subr.mxu0 0.0
        %291 = vmatpush1.xpose.msra.mxu0 %v237
        %292 = vmatprep.subr.mxu0 0.0
        %293 = vmatpush2.xpose.msra.mxu0 0.0
        %294 = vmatprep.subr.mxu0 0.0
        %295 = vmatpush2.xpose.msra.mxu0 0.0
        %296 = vmatprep.subr.mxu0 0.0
        %297 = vmatpush2.xpose.msra.mxu0 0.0
        %298 = vmatprep.subr.mxu0 0.0
        %299 = vmatpush2.xpose.msra.mxu0 0.0
        %300 = vmatprep.subr.mxu0 0.0
        %301 = vmatpush2.xpose.msra.mxu0 0.0
        %302 = vmatprep.subr.mxu0 0.0
        %303 = vmatpush2.xpose.msra.mxu0 0.0
        %304 = vmatprep.subr.mxu0 0.0
        %305 = vmatpush2.xpose.msra.mxu0 0.0
        %306 = vmatprep.subr.mxu0 0.0
        %307 = vmatpush2.xpose.msra.mxu0 0.0
        %308 = vmatprep.subr.mxu0 0.0
        %309 = vmatpush2.xpose.msra.mxu0 0.0
        %310 = vmatprep.subr.mxu0 0.0
        %311 = vmatpush2.xpose.msra.mxu0 0.0
        %312 = vmatprep.subr.mxu0 0.0
        %313 = vmatpush2.xpose.msra.mxu0 0.0
        %314 = vmatprep.subr.mxu0 0.0
        %315 = vmatpush2.xpose.msra.mxu0 0.0
        %316 = vmatprep.subr.mxu0 0.0
        %317 = vmatpush2.xpose.msra.mxu0 0.0
        %318 = vmatprep.subr.mxu0 0.0
        %319 = vmatpush2.xpose.msra.mxu0 0.0
        %320 = vmatprep.subr.mxu0 0.0
        %321 = vmatpush2.xpose.msra.mxu0 0.0
        %322 = vmatprep.subr.mxu0 0.0
        %323 = vmatpush2.xpose.msra.mxu0 0.0
        %324 = vmatprep.mubr.f32.mxu0 0.0
        %325 = vmatmul.mubr.f32.gmra.mxu0 %v234
        %v326 = vpop.f32.mrf.mxu0
        %v327 = vadd.f32 %v230, %v326
        %v328 = vpop.f32.mrf.mxu0
        %329 = vdwg.mxu0
        %vm330 = vcmask 523264
        %331 = vst.msk [vmem:[%s202] sm:$0xff] %vm330, %v327
        %s332 = sand.u32 %s117, 1
        %s333 = scalar_lea.sflag [#allocation3], %s332
        %s334 = sand.u32 %s117, 1
        %s335 = smul.addr %s334, 8
        %s336 = scalar_lea.vmem [#allocation2], %s335
        // Predicated region
        $region33: #{mlp_encoder.1} parent=31 // pred_check
          %p337 = pneg %p127
        $region34: #{mlp_encoder.1} parent=31 // pred_check_branch
          %339 = sbr.rel (%p337) target = $region36
        $region35: #{mlp_encoder.1} parent=31 // pred_region
          %s341 = ssub.s32 128, 128
          %342 = vsyncadd %s333, %s341
          %s343 = sadd.s32 %s22, %s21
          %s344 = smul.addr %s343, 128
          %s345 = scalar_lea.hbm %s3, %s344
          %s347 = sshll.u32 %s336, 4
          %s348 = int_to_ptr.vmem [resolvable:$true] %s347
          %350 = dma.vmem_to_hbm [thread:$0]  %s348, 128, %s345, %s333
        $region36: #{mlp_encoder.1} parent=31 // pred_fallthru
          _
      $region32: #{mlp_encoder.1} parent=5 // pred_fallthru
        _
      %p351 = scmp.le.s32.totalorder 2, %s12
      // Predicated region
      $region37: #{mlp_encoder.1} parent=5 // pred_check
        %p352 = pneg %p351
      $region38: #{mlp_encoder.1} parent=5 // pred_check_branch
        %354 = sbr.rel (%p352) target = $region40
      $region39: #{mlp_encoder.1} parent=5 // pred_region
        %s355 = ssub.s32 %s12, 2
        // Predicated region
        $region41: #{mlp_encoder.1} parent=39 // pred_check
          %p356 = pneg %p133
        $region42: #{mlp_encoder.1} parent=39 // pred_check_branch
          %358 = sbr.rel (%p356) target = $region44
        $region43: #{mlp_encoder.1} parent=39 // pred_region
          %s359 = sand.u32 %s118, 1
          %s360 = scalar_lea.sflag [#allocation3], %s359
          %s361 = sand.u32 %s118, 1
          %s362 = smul.addr %s361, 8
          %s363 = scalar_lea.vmem [#allocation2], %s362
          %364 = dma.done %s360, 128
        $region44: #{mlp_encoder.1} parent=39 // pred_fallthru
          _
      $region40: #{mlp_encoder.1} parent=5 // pred_fallthru
        _
    $region6: #{mlp_encoder.1} parent=1 // loop_footer
      %s16 = sadd.s32 1, %s12
    $region7: #{mlp_encoder.1} parent=1 // loop_footer_branch
      %11 = sbr.rel target = $region3
    $region8: #{mlp_encoder.1} parent=1 // loop_exit
      _
    %365 = vsyncpa [#allocation3], 1
    %s366 = scalar_lea.sflag [#allocation3], 1
    %367 = vsyncpa %s366, 1

</llo_original>
